<compile_context>
chip_gen: v7x
topology: tpu7x:2x2x1
jax: 0.10.0
libtpu: 0.0.40
codegen_flags: <defaults>
</compile_context>

<pallas_src>
import math
import functools

import jax
import jax.numpy as jnp
from jax.experimental import pallas as pl
from jax.experimental.pallas import tpu as pltpu

_LANE = 128
_MAX_COLS = 8192                      # widest lane-dense slab we build
_BLOCK_BYTES = 4 * 1024 * 1024        # per-buffer block target (~4 MiB)


# ----------------------------------------------------------------------------
# 1) ActivateFun (elementwise relu / exact gelu)
# ----------------------------------------------------------------------------
def _activate_kernel(x_ref, o_ref, *, kind):
    x = x_ref[...]
    if kind == "relu":
        o_ref[...] = jnp.maximum(x, 0).astype(o_ref.dtype)
    else:  # "gelu": x * 0.5 * (1 + erf(x / sqrt(2)))  (exact, matches torch.erf)
        xf = x.astype(jnp.float32)
        y = xf * 0.5 * (1.0 + jax.lax.erf(xf * (1.0 / math.sqrt(2.0))))
        o_ref[...] = y.astype(o_ref.dtype)


def _sublane_multiple(dtype):
    """Natural sublane multiple: 8 for 4-byte, 16 for 2-byte, 32 for 1-byte."""
    itemsize = jnp.dtype(dtype).itemsize
    return max(8, 32 // max(1, itemsize))


def activate_fun(x, kind="gelu"):
    """Pallas TPU implementation of ActivateFun.forward (relu / gelu)."""
    if kind not in ("relu", "gelu"):
        # PyTorch module silently returns None for other strings; fail loudly.
        raise ValueError(f"unsupported activate_fun: {kind!r}")

    orig_shape = x.shape
    orig_dtype = x.dtype
    n = x.size
    if n == 0:
        return x

    # Build a lane-dense 2D slab (rows, cols): cols = widest multiple of 128
    # (<= _MAX_COLS) that divides n -> no padding, no trailing slice.
    cols = None
    if n % _LANE == 0:
        c = _LANE
        limit = min(n, _MAX_COLS)
        while c <= limit:
            if n % c == 0:
                cols = c
            c += _LANE
    if cols is not None:
        x2d = x.reshape(-1, cols)
        pad = 0
    else:
        # Rare fallback: element count not a multiple of 128 -> minimal pad
        # (< 128 elements), masked back out after the kernel.
        flat = x.reshape(-1)
        pad = (-n) % _LANE
        flat = jnp.pad(flat, (0, pad))
        cols = _LANE
        x2d = flat.reshape(-1, cols)

    rows = x2d.shape[0]
    itemsize = jnp.dtype(orig_dtype).itemsize
    sub = _sublane_multiple(orig_dtype)
    rows_per_block = max(sub, _BLOCK_BYTES // (cols * itemsize))
    if rows_per_block >= rows:
        row_tile = rows                              # single block (full dim is legal)
    else:
        row_tile = max(sub, (rows_per_block // sub) * sub)   # dtype-aware alignment

    grid = (pl.cdiv(rows, row_tile),)

    out2d = pl.pallas_call(
        functools.partial(_activate_kernel, kind=kind),
        out_shape=jax.ShapeDtypeStruct((rows, cols), orig_dtype),
        grid_spec=pltpu.PrefetchScalarGridSpec(
            num_scalar_prefetch=0,
            grid=grid,
            in_specs=[pl.BlockSpec((row_tile, cols), lambda i: (i, 0))],
            out_specs=pl.BlockSpec((row_tile, cols), lambda i: (i, 0)),
        ),
        compiler_params=pltpu.CompilerParams(
            dimension_semantics=("parallel",),
            # 4 MiB blocks, in+out double buffered = 16 MiB resident; raise the
            # scoped limit explicitly so this is also legal on v5e (16 MiB default).
            vmem_limit_bytes=32 * 1024 * 1024,
        ),
    )(x2d)

    if pad:
        return out2d.reshape(-1)[:n].reshape(orig_shape)
    return out2d.reshape(orig_shape)


# ----------------------------------------------------------------------------
# 2) Fused Linear -> GELU -> Linear (the *_linear_change heads of FuseModel)
#    bf16 MXU matmuls, f32 accumulation; activation fused into its producer.
# ----------------------------------------------------------------------------
def _linear_gelu_linear_kernel(x_ref, w1_ref, b1_ref, w2_ref, b2_ref, o_ref):
    # bf16 x bf16 -> f32 accumulate on the MXU (no operand upcast).
    h = jnp.dot(x_ref[...], w1_ref[...], preferred_element_type=jnp.float32)
    h = h + b1_ref[...].astype(jnp.float32)
    # exact erf GELU in f32 on the accumulator, identical to ActivateFun('gelu')
    h = h * 0.5 * (1.0 + jax.lax.erf(h * (1.0 / math.sqrt(2.0))))
    y = jnp.dot(h.astype(w2_ref.dtype), w2_ref[...],
                preferred_element_type=jnp.float32)
    y = y + b2_ref[...].astype(jnp.float32)
    o_ref[...] = y.astype(o_ref.dtype)


def _choose_row_tile(n, sublane=16):
    """M tile: 256 for large n (fills the v6e/v7x 256-wide MXU); for small n
    split into >=2 grid steps when possible so both v7x TensorCores get work."""
    if n <= sublane:
        return n
    if n > 512:
        return 256
    half = -(-n // 2)
    tm = -(-half // sublane) * sublane
    return min(tm, n)


def linear_gelu_linear(x, w1, b1, w2, b2):
    """y = gelu(x @ w1 + b1) @ w2 + b2  (weights stored as (in, out)).

    Matmul operands are cast to bf16 once in the wrapper (deliberate precision
    choice); accumulation, bias adds and GELU stay in f32.
    """
    n, d_in = x.shape
    d_hid = w1.shape[1]
    d_out = w2.shape[1]
    out_dtype = x.dtype

    # Pre-cast activations + weights to bf16: halves DMA and resident weight
    # VMEM, and feeds the MXU its native input dtype.
    xc = x.astype(jnp.bfloat16)
    w1c = w1.astype(jnp.bfloat16)
    w2c = w2.astype(jnp.bfloat16)
    b1c = b1.reshape(1, d_hid).astype(jnp.float32)
    b2c = b2.reshape(1, d_out).astype(jnp.float32)

    tm = _choose_row_tile(n)
    grid = (pl.cdiv(n, tm),)

    out_itemsize = jnp.dtype(out_dtype).itemsize
    cost = pl.CostEstimate(
        flops=2 * n * d_in * d_hid + 2 * n * d_hid * d_out,
        transcendentals=n * d_hid,
        bytes_accessed=(xc.size * 2 + w1c.size * 2 + w2c.size * 2
                        + b1c.size * 4 + b2c.size * 4 + n * d_out * out_itemsize),
    )

    return pl.pallas_call(
        _linear_gelu_linear_kernel,
        out_shape=jax.ShapeDtypeStruct((n, d_out), out_dtype),
        grid_spec=pltpu.PrefetchScalarGridSpec(
            num_scalar_prefetch=0,
            grid=grid,
            in_specs=[
                pl.BlockSpec((tm, d_in), lambda i: (i, 0)),
                # Resident weights/biases: constant index_map -> single buffer.
                pl.BlockSpec((d_in, d_hid), lambda i: (0, 0),
                             pipeline_mode=pl.Buffered(1)),
                pl.BlockSpec((1, d_hid), lambda i: (0, 0),
                             pipeline_mode=pl.Buffered(1)),
                pl.BlockSpec((d_hid, d_out), lambda i: (0, 0),
                             pipeline_mode=pl.Buffered(1)),
                pl.BlockSpec((1, d_out), lambda i: (0, 0),
                             pipeline_mode=pl.Buffered(1)),
            ],
            out_specs=pl.BlockSpec((tm, d_out), lambda i: (i, 0)),
        ),
        compiler_params=pltpu.CompilerParams(
            dimension_semantics=("parallel",),
        ),
        cost_estimate=cost,
    )(xc, w1c, b1c, w2c, b2c)


# ----------------------------------------------------------------------------
# references + smoke test
# ----------------------------------------------------------------------------
def _gelu_ref(x):
    xf = x.astype(jnp.float32)
    return (xf * 0.5 * (1.0 + jax.lax.erf(xf / math.sqrt(2.0)))).astype(x.dtype)


def _mlp_ref_f32(x, w1, b1, w2, b2):
    hp = jax.lax.Precision.HIGHEST
    h = jnp.dot(x, w1, precision=hp) + b1
    h = _gelu_ref(h)
    return jnp.dot(h, w2, precision=hp) + b2


def _mlp_ref_bf16(x, w1, b1, w2, b2):
    # Same precision choice as the kernel: bf16 operands, f32 accumulation.
    xb = x.astype(jnp.bfloat16)
    w1b = w1.astype(jnp.bfloat16)
    w2b = w2.astype(jnp.bfloat16)
    h = jnp.dot(xb, w1b, preferred_element_type=jnp.float32) + b1
    h = h * 0.5 * (1.0 + jax.lax.erf(h / math.sqrt(2.0)))
    y = jnp.dot(h.astype(jnp.bfloat16), w2b, preferred_element_type=jnp.float32) + b2
    return y.astype(x.dtype)


if __name__ == "__main__":
    key = jax.random.PRNGKey(0)
    k0, k1, k2, k3, k4, k5, k6 = jax.random.split(key, 7)

    # --- ActivateFun: even (no-pad, lane-dense) path -------------------------
    x = jax.random.normal(k0, (2, 4, 16, 16), dtype=jnp.float32)
    y_gelu = jax.block_until_ready(activate_fun(x, "gelu"))
    y_relu = jax.block_until_ready(activate_fun(x, "relu"))
    assert jnp.allclose(y_gelu, _gelu_ref(x), atol=1e-6), "gelu mismatch"
    assert jnp.allclose(y_relu, jnp.maximum(x, 0.0), atol=0.0), "relu mismatch"
    assert y_gelu.shape == x.shape and y_gelu.dtype == x.dtype

    # --- ActivateFun: bf16 input (dtype-aware sublane path) ------------------
    x_b = x.astype(jnp.bfloat16)
    y_b = jax.block_until_ready(activate_fun(x_b, "gelu"))
    assert y_b.dtype == jnp.bfloat16 and y_b.shape == x_b.shape
    assert jnp.allclose(y_b.astype(jnp.float32),
                        _gelu_ref(x_b).astype(jnp.float32),
                        atol=2e-2, rtol=2e-2), "bf16 gelu mismatch"

    # --- ActivateFun: ragged (minimal-pad fallback) path ----------------------
    x_r = jax.random.normal(k1, (3, 5, 7), dtype=jnp.float32)
    y_r = jax.block_until_ready(activate_fun(x_r, "gelu"))
    assert jnp.allclose(y_r, _gelu_ref(x_r), atol=1e-6), "ragged gelu mismatch"
    assert y_r.shape == x_r.shape

    # --- Fused Linear -> GELU -> Linear (orgin_linear_change, tran_dim=768) ---
    tran_dim = 768
    batch = 8
    xm = jax.random.normal(k2, (batch, 2 * tran_dim), dtype=jnp.float32)
    w1 = jax.random.normal(k3, (2 * tran_dim, tran_dim), dtype=jnp.float32)
    w1 = w1 * (1.0 / math.sqrt(2 * tran_dim))
    b1 = jax.random.normal(k4, (tran_dim,), dtype=jnp.float32) * 0.02
    w2 = jax.random.normal(k5, (tran_dim, tran_dim), dtype=jnp.float32)
    w2 = w2 * (1.0 / math.sqrt(tran_dim))
    b2 = jax.random.normal(k6, (tran_dim,), dtype=jnp.float32) * 0.02

    y_mlp = jax.block_until_ready(linear_gelu_linear(xm, w1, b1, w2, b2))
    assert y_mlp.shape == (batch, tran_dim) and y_mlp.dtype == xm.dtype

    # Tight check against a reference with the same bf16-operand precision choice.
    y_ref_bf16 = _mlp_ref_bf16(xm, w1, b1, w2, b2)
    assert jnp.allclose(y_mlp, y_ref_bf16, atol=1e-3, rtol=1e-3), \
        "fused MLP mismatch vs bf16 reference"
    # Looser sanity check against the full-f32 torch-equivalent reference.
    y_ref_f32 = _mlp_ref_f32(xm, w1, b1, w2, b2)
    assert jnp.allclose(y_mlp, y_ref_f32, atol=5e-2, rtol=5e-2), \
        "fused MLP mismatch vs f32 reference"

    print("KERNEL_OK")
</pallas_src>

<mosaic_0001>
module attributes {stable_mosaic.version = 11 : i64} {
  func.func @_activate_kernel(%arg0: i32, %arg1: memref<1x2048xf32, #tpu.memory_space<vmem>>, %arg2: memref<1x2048xf32, #tpu.memory_space<vmem>>) attributes {dimension_semantics = [#tpu.dimension_semantics<parallel>], iteration_bounds = array<i64: 1>, scalar_prefetch = 0 : i64, scratch_operands = 0 : i64, tpu.core_type = #tpu.core_type<tc>, window_params = [{transform_indices = @transform_0, window_bounds = array<i64: 1, 2048>}, {transform_indices = @transform_1, window_bounds = array<i64: 1, 2048>}]} {
    %c0 = arith.constant 0 : index
    %c0_0 = arith.constant 0 : index
    %0 = vector.load %arg1[%c0, %c0_0] : memref<1x2048xf32, #tpu.memory_space<vmem>>, vector<1x2048xf32>
    %cst = arith.constant 5.000000e-01 : f32
    %1 = vector.broadcast %cst : f32 to vector<1x2048xf32>
    %2 = arith.mulf %0, %1 : vector<1x2048xf32>
    %cst_1 = arith.constant 0.707106769 : f32
    %3 = vector.broadcast %cst_1 : f32 to vector<1x2048xf32>
    %4 = arith.mulf %0, %3 : vector<1x2048xf32>
    %5 = math.erf %4 : vector<1x2048xf32>
    %cst_2 = arith.constant 1.000000e+00 : f32
    %6 = vector.broadcast %cst_2 : f32 to vector<1x2048xf32>
    %7 = arith.addf %6, %5 : vector<1x2048xf32>
    %8 = arith.mulf %2, %7 : vector<1x2048xf32>
    %c0_3 = arith.constant 0 : index
    %c0_4 = arith.constant 0 : index
    %9 = vector.load %arg2[%c0_3, %c0_4] : memref<1x2048xf32, #tpu.memory_space<vmem>>, vector<1x2048xf32>
    tpu.vector_store %arg2[%c0_3, %c0_4], %8 {strides = array<i32>} : memref<1x2048xf32, #tpu.memory_space<vmem>>, vector<1x2048xf32>,
    return
  }
  func.func @transform_0(%arg0: i32) -> (i32, i32) {
    %c0_i32 = arith.constant 0 : i32
    %c0_i32_0 = arith.constant 0 : i32
    return %arg0, %c0_i32 : i32, i32
  }
  func.func @transform_1(%arg0: i32) -> (i32, i32) {
    %c0_i32 = arith.constant 0 : i32
    %c0_i32_0 = arith.constant 0 : i32
    return %arg0, %c0_i32 : i32, i32
  }
}

</mosaic_0001>

<llo_original>
// kernel: tpu_custom_call.1
$region0: #{tpu_custom_call.1}
  #allocation0 [shape = 'u32[]', space=smem, size = 0x4, offset = 0x4, fixed_abs, tag = 'smem constant byte address 0x4 - core index']
  #allocation1 [shape = 'u32[144,128]{1,0:T(1,128)}', space=vmem, size = 0x12000, scoped, tag = 'internal scratch']
  %s0 = inlined_call_operand.hbm [shape: f32[1,2048], index: 0, kind: input, shape index: {}]
  %s1 = inlined_call_operand.hbm [shape: f32[1,2048], index: 1, kind: output, shape index: {}]
  %s2 = sld [smem:[#allocation0]]
  $region18: #{tpu_custom_call.1} parent=0
    _
  %s4 = ssub.s32 1, %s2
  %s5 = scalar_select 0, %s4, %s2
  $region1: #{tpu_custom_call.1} parent=0
    #allocation2 [shape = 'u8[8192]{0}', space=vmem, size = 0x2000, scoped, tag = 'input window, operand 0, single buffered']
    #allocation3 [shape = 's32[1]{0}', space=sflag, size = 0x4, scoped, tag = 'scoped memory for tpu_custom_call.1']
    #allocation4 [shape = 's32[1]{0}', space=sflag, size = 0x4, scoped, tag = 'scoped memory for tpu_custom_call.1']
    #allocation5 [shape = 'u8[8192]{0}', space=vmem, size = 0x2000, scoped, tag = 'output window, operand 0, single buffered']
    %6 = vsyncpa [#allocation3], 0
    %7 = vsyncpa [#allocation4], 0
    // Predicated region
    $region2: #{tpu_custom_call.1} parent=1 // pred_check
      _
    $region3: #{tpu_custom_call.1} parent=1 // pred_check_branch
      %9 = sbr.rel (0) target = $region5
    $region4: #{tpu_custom_call.1} parent=1 // pred_region
      %s11 = ssub.s32 256, 256
      %12 = vsyncadd [#allocation3], %s11
      %s14 = sshll.u32 [#allocation2], 4
      %s15 = int_to_ptr.vmem [resolvable:$true] %s14
      %17 = dma.hbm_to_vmem [thread:$0]  %s0, 256, %s15, [#allocation3]
    $region5: #{tpu_custom_call.1} parent=1 // pred_fallthru
      _
    // Predicated region
    $region6: #{tpu_custom_call.1} parent=1 // pred_check
      _
    $region7: #{tpu_custom_call.1} parent=1 // pred_check_branch
      %19 = sbr.rel (0) target = $region9
    $region8: #{tpu_custom_call.1} parent=1 // pred_region
      %20 = dma.done [#allocation3], 256
    $region9: #{tpu_custom_call.1} parent=1 // pred_fallthru
      _
    %v21 = vld [vmem:[#allocation2] sm:$0xff]
    %v22 = vld [vmem:[#allocation2 + $0x8] sm:$0xff]
    %v23 = vmul.f32 %v21, 0.5
    %v24 = vmul.f32 %v22, 0.5
    %v25 = vmul.f32 %v21, 0.70710677
    %v26 = vmul.f32 %v22, 0.70710677
    %v27 = verf.f32.pop %v25
    %v28 = verf.f32.pop %v26
    %v29 = vadd.f32 %v27, 1.0
    %v30 = vadd.f32 %v28, 1.0
    %v31 = vmul.f32 %v23, %v29
    %v32 = vmul.f32 %v24, %v30
    %33 = vst [vmem:[#allocation5] sm:$0xff] %v31
    %34 = vst [vmem:[#allocation5 + $0x8] sm:$0xff] %v32
    // Predicated region
    $region10: #{tpu_custom_call.1} parent=1 // pred_check
      _
    $region11: #{tpu_custom_call.1} parent=1 // pred_check_branch
      %36 = sbr.rel (0) target = $region13
    $region12: #{tpu_custom_call.1} parent=1 // pred_region
      %s38 = ssub.s32 256, 256
      %39 = vsyncadd [#allocation4], %s38
      %s41 = sshll.u32 [#allocation5], 4
      %s42 = int_to_ptr.vmem [resolvable:$true] %s41
      %44 = dma.vmem_to_hbm [thread:$0]  %s42, 256, %s1, [#allocation4]
    $region13: #{tpu_custom_call.1} parent=1 // pred_fallthru
      _
    // Predicated region
    $region14: #{tpu_custom_call.1} parent=1 // pred_check
      _
    $region15: #{tpu_custom_call.1} parent=1 // pred_check_branch
      %46 = sbr.rel (0) target = $region17
    $region16: #{tpu_custom_call.1} parent=1 // pred_region
      %47 = dma.done [#allocation4], 256
    $region17: #{tpu_custom_call.1} parent=1 // pred_fallthru
      _
    %48 = vsyncpa [#allocation3], 1
    %49 = vsyncpa [#allocation4], 1

</llo_original>
